<compile_context>
chip_gen: v5e
topology: v5e:2x2
jax: 0.10.0
libtpu: 0.0.40
codegen_flags: <defaults>
</compile_context>

<pallas_src>
import jax
import jax.numpy as jnp
from jax.experimental import pallas as pl
from jax.experimental.pallas import tpu as pltpu


def _round_up(n, m):
    return ((n + m - 1) // m) * m


def mlp_pass_kernel(x_ref, w1_ref, b1_ref, w2_ref, b2_ref, w3_ref, b3_ref, o_ref):
    # x tile: (TB, 40) bf16; weights bf16 (MXU-native), biases f32, f32 accumulation.
    x = x_ref[...]
    h1 = jnp.dot(x, w1_ref[...], preferred_element_type=jnp.float32) + b1_ref[...]
    h1 = jnp.maximum(h1, 0.0)                                  # relu, f32 (TB, 256)
    h2 = jnp.dot(h1.astype(jnp.bfloat16), w2_ref[...],
                 preferred_element_type=jnp.float32) + b2_ref[...]
    h2 = jnp.maximum(h2, 0.0)                                  # relu, f32 (TB, 32)
    # Layer 3 has N=1: a (TB,32)@(32,1) matmul would use 1 of 128/256 MXU output
    # columns. Do it as a VPU broadcast-multiply + XLU lane-reduce instead, which
    # frees the MXU slot (the binding unit after the layer-1/2 matmuls).
    logits = jnp.sum(h2 * w3_ref[...], axis=-1, keepdims=True) + b3_ref[0, 0]
    # Output store stays (TB, 1): making it lane-dense would require a
    # sublane->lane relayout of the per-row results inside the kernel, which costs
    # more XLU work than the 4 B/row it saves (x traffic at ~80 B/row dominates).
    o_ref[...] = jax.nn.sigmoid(logits)                        # EUP


def mlp_pass(x, w1, b1, w2, b2, w3, b3, *, block_rows=1024):
    """Fused 3-layer MLP forward: Linear+ReLU, Linear+ReLU, Linear+Sigmoid."""
    B, inp_dim = x.shape

    # Batch tile: multiple of 16 (bf16 sublane packing). Default 1024 rows keeps
    # VMEM use (~2 MiB: weights + double-buffered x tiles + (TB,256) f32 h1) far
    # under v7x's 64 MiB physical / 32 MiB default-scoped VMEM while amortizing
    # the ~0.35 us/step grid overhead.
    block_rows = max(16, _round_up(block_rows, 16))
    TB = min(block_rows, _round_up(B, 16))
    num_tiles = pl.cdiv(B, TB)
    B_pad = num_tiles * TB
    if B_pad != B:
        x = jnp.pad(x, ((0, B_pad - B), (0, 0)))

    # bf16 matmul operands (f32 accumulation inside the kernel). Biases,
    # activations and the layer-3 VPU dot stay f32 (v5e has no bf16 VPU/EUP path).
    xb = x.astype(jnp.bfloat16)
    w1b = w1.astype(jnp.bfloat16)
    w2b = w2.astype(jnp.bfloat16)
    w3_row = w3.reshape(1, -1).astype(jnp.float32)   # (1, 32)
    b3_s = b3.reshape(1, 1).astype(jnp.float32)      # scalar -> SMEM

    h1_dim = w1.shape[1]
    h2_dim = w2.shape[1]
    flops = 2 * B_pad * (inp_dim * h1_dim + h1_dim * h2_dim + h2_dim)
    bytes_accessed = (B_pad * inp_dim * 2 + B_pad * 4
                      + (inp_dim * h1_dim + h1_dim * h2_dim) * 2
                      + (h1_dim + 2 * h2_dim + 1) * 4)

    def resident(shape):
        # Whole array as one block with a constant block index: Pallas keeps it
        # resident in VMEM across grid iterations (no re-DMA).
        return pl.BlockSpec(shape, lambda i: tuple(0 for _ in shape))

    out = pl.pallas_call(
        mlp_pass_kernel,
        out_shape=jax.ShapeDtypeStruct((B_pad, 1), jnp.float32),
        grid=(num_tiles,),
        in_specs=[
            pl.BlockSpec((TB, inp_dim), lambda i: (i, 0)),   # x: tiled over batch
            resident(w1b.shape), resident(b1.shape),
            resident(w2b.shape), resident(b2.shape),
            resident(w3_row.shape),
            pl.BlockSpec((1, 1), lambda i: (0, 0),
                         memory_space=pltpu.MemorySpace.SMEM),  # b3 scalar
        ],
        out_specs=pl.BlockSpec((TB, 1), lambda i: (i, 0)),
        compiler_params=pltpu.CompilerParams(
            dimension_semantics=("parallel",)),   # shard batch tiles across v7x's 2 TCs
        cost_estimate=pl.CostEstimate(
            flops=flops, transcendentals=B_pad, bytes_accessed=bytes_accessed),
    )(xb, w1b, b1, w2b, b2, w3_row, b3_s)

    return out[:B]


def init_params(key, inp_dim=40):
    """Deterministic parameter init mirroring the PyTorch module's shapes.

    Weights: xavier_normal (gain=1), std = sqrt(2 / (fan_in + fan_out)).
    Biases: uniform(-1/sqrt(fan_in), 1/sqrt(fan_in)) like nn.Linear default.
    Stored transposed as (in, out) for the x @ W convention.
    """
    dims = [(inp_dim, 256), (256, 32), (32, 1)]
    params = []
    keys = jax.random.split(key, 2 * len(dims))
    for i, (fan_in, fan_out) in enumerate(dims):
        std = (2.0 / (fan_in + fan_out)) ** 0.5
        w = std * jax.random.normal(keys[2 * i], (fan_in, fan_out), jnp.float32)
        bound = 1.0 / (fan_in ** 0.5)
        b = jax.random.uniform(keys[2 * i + 1], (1, fan_out), jnp.float32,
                               minval=-bound, maxval=bound)
        params.extend([w, b])
    return params


if __name__ == "__main__":
    inp_dim = 40
    batch = 300        # not a multiple of the tile -> exercises padding + slicing
    block_rows = 128   # small tile so the demo runs several grid steps (3 tiles)

    key = jax.random.PRNGKey(0)
    k_x, k_p = jax.random.split(key)
    x = jax.random.normal(k_x, (batch, inp_dim), jnp.float32)
    w1, b1, w2, b2, w3, b3 = init_params(k_p, inp_dim)

    out = mlp_pass(x, w1, b1, w2, b2, w3, b3, block_rows=block_rows)
    out = jax.block_until_ready(out)
    assert out.shape == (batch, 1)

    # Reference matching the kernel's bf16-operand / f32-accumulate numerics.
    h1 = jnp.maximum(jnp.dot(x.astype(jnp.bfloat16), w1.astype(jnp.bfloat16),
                             preferred_element_type=jnp.float32) + b1, 0.0)
    h2 = jnp.maximum(jnp.dot(h1.astype(jnp.bfloat16), w2.astype(jnp.bfloat16),
                             preferred_element_type=jnp.float32) + b2, 0.0)
    logits = jnp.sum(h2 * w3.reshape(1, -1), axis=-1, keepdims=True) + b3
    ref = jax.nn.sigmoid(logits)
    assert jnp.allclose(out, ref, atol=1e-4, rtol=1e-4), \
        float(jnp.max(jnp.abs(out - ref)))

    # Loose check against the full-f32 forward (original PyTorch semantics).
    r = jnp.maximum(x @ w1 + b1, 0.0)
    r = jnp.maximum(r @ w2 + b2, 0.0)
    ref32 = jax.nn.sigmoid(r @ w3 + b3)
    assert jnp.allclose(out, ref32, atol=5e-2), \
        float(jnp.max(jnp.abs(out - ref32)))

    print("KERNEL_OK")
</pallas_src>

<mosaic_0001>
module attributes {stable_mosaic.version = 11 : i64} {
  func.func @mlp_pass_kernel(%arg0: i32, %arg1: memref<128x40xbf16, #tpu.memory_space<vmem>>, %arg2: memref<40x256xbf16, #tpu.memory_space<vmem>>, %arg3: memref<1x256xf32, #tpu.memory_space<vmem>>, %arg4: memref<256x32xbf16, #tpu.memory_space<vmem>>, %arg5: memref<1x32xf32, #tpu.memory_space<vmem>>, %arg6: memref<1x32xf32, #tpu.memory_space<vmem>>, %arg7: memref<1x1xf32, #tpu.memory_space<smem>>, %arg8: memref<128x1xf32, #tpu.memory_space<vmem>>) attributes {dimension_semantics = [#tpu.dimension_semantics<parallel>], iteration_bounds = array<i64: 3>, scalar_prefetch = 0 : i64, scratch_operands = 0 : i64, tpu.core_type = #tpu.core_type<tc>, window_params = [{transform_indices = @transform_0, window_bounds = array<i64: 128, 40>}, {pipeline_mode = #tpu.pipeline_mode<synchronous>, transform_indices = @transform_1, window_bounds = array<i64: 40, 256>}, {pipeline_mode = #tpu.pipeline_mode<synchronous>, transform_indices = @transform_2, window_bounds = array<i64: 1, 256>}, {pipeline_mode = #tpu.pipeline_mode<synchronous>, transform_indices = @transform_3, window_bounds = array<i64: 256, 32>}, {pipeline_mode = #tpu.pipeline_mode<synchronous>, transform_indices = @transform_4, window_bounds = array<i64: 1, 32>}, {pipeline_mode = #tpu.pipeline_mode<synchronous>, transform_indices = @transform_5, window_bounds = array<i64: 1, 32>}, {transform_indices = @transform_6, window_bounds = array<i64: 1, 1>}, {transform_indices = @transform_7, window_bounds = array<i64: 128, 1>}]} {
    %c0 = arith.constant 0 : index
    %c0_0 = arith.constant 0 : index
    %0 = vector.load %arg1[%c0, %c0_0] : memref<128x40xbf16, #tpu.memory_space<vmem>>, vector<128x40xbf16>
    %c0_1 = arith.constant 0 : index
    %c0_2 = arith.constant 0 : index
    %1 = vector.load %arg2[%c0_1, %c0_2] : memref<40x256xbf16, #tpu.memory_space<vmem>>, vector<40x256xbf16>
    %cst = arith.constant dense<0.000000e+00> : vector<128x256xf32>
    %2 = tpu.matmul %0, %1, %cst {dimension_numbers = #tpu.dot_dimension_numbers<[1], [0], [0], [1], [0, 0, 1, 1], [], []>} : vector<128x40xbf16>, vector<40x256xbf16>, vector<128x256xf32> -> vector<128x256xf32>
    %c0_3 = arith.constant 0 : index
    %c0_4 = arith.constant 0 : index
    %3 = vector.load %arg3[%c0_3, %c0_4] : memref<1x256xf32, #tpu.memory_space<vmem>>, vector<1x256xf32>
    %4 = vector.broadcast %3 : vector<1x256xf32> to vector<128x256xf32>
    %5 = arith.addf %2, %4 : vector<128x256xf32>
    %cst_5 = arith.constant 0.000000e+00 : f32
    %6 = vector.broadcast %cst_5 : f32 to vector<128x256xf32>
    %7 = arith.maximumf %5, %6 : vector<128x256xf32>
    %8 = arith.truncf %7 : vector<128x256xf32> to vector<128x256xbf16>
    %c0_6 = arith.constant 0 : index
    %c0_7 = arith.constant 0 : index
    %9 = vector.load %arg4[%c0_6, %c0_7] : memref<256x32xbf16, #tpu.memory_space<vmem>>, vector<256x32xbf16>
    %cst_8 = arith.constant dense<0.000000e+00> : vector<128x32xf32>
    %10 = tpu.matmul %8, %9, %cst_8 {dimension_numbers = #tpu.dot_dimension_numbers<[1], [0], [0], [1], [0, 0, 1, 1], [], []>} : vector<128x256xbf16>, vector<256x32xbf16>, vector<128x32xf32> -> vector<128x32xf32>
    %c0_9 = arith.constant 0 : index
    %c0_10 = arith.constant 0 : index
    %11 = vector.load %arg5[%c0_9, %c0_10] : memref<1x32xf32, #tpu.memory_space<vmem>>, vector<1x32xf32>
    %12 = vector.broadcast %11 : vector<1x32xf32> to vector<128x32xf32>
    %13 = arith.addf %10, %12 : vector<128x32xf32>
    %cst_11 = arith.constant 0.000000e+00 : f32
    %14 = vector.broadcast %cst_11 : f32 to vector<128x32xf32>
    %15 = arith.maximumf %13, %14 : vector<128x32xf32>
    %c0_12 = arith.constant 0 : index
    %c0_13 = arith.constant 0 : index
    %16 = vector.load %arg6[%c0_12, %c0_13] : memref<1x32xf32, #tpu.memory_space<vmem>>, vector<1x32xf32>
    %17 = vector.broadcast %16 : vector<1x32xf32> to vector<128x32xf32>
    %18 = arith.mulf %15, %17 : vector<128x32xf32>
    %cst_14 = arith.constant dense<0.000000e+00> : vector<128xf32>
    %19 = vector.multi_reduction <add>, %18, %cst_14 [1] : vector<128x32xf32> to vector<128xf32>
    %20 = vector.shape_cast %19 : vector<128xf32> to vector<128x1xf32>
    %c0_15 = arith.constant 0 : index
    %c0_16 = arith.constant 0 : index
    %21 = memref.load %arg7[%c0_15, %c0_16] : memref<1x1xf32, #tpu.memory_space<smem>>
    %22 = vector.broadcast %21 : f32 to vector<128x1xf32>
    %23 = arith.addf %20, %22 : vector<128x1xf32>
    %24 = arith.negf %23 : vector<128x1xf32>
    %25 = math.exp %24 : vector<128x1xf32>
    %cst_17 = arith.constant 1.000000e+00 : f32
    %26 = vector.broadcast %cst_17 : f32 to vector<128x1xf32>
    %27 = arith.addf %26, %25 : vector<128x1xf32>
    %28 = arith.divf %26, %27 : vector<128x1xf32>
    %c0_18 = arith.constant 0 : index
    %c0_19 = arith.constant 0 : index
    %29 = vector.load %arg8[%c0_18, %c0_19] : memref<128x1xf32, #tpu.memory_space<vmem>>, vector<128x1xf32>
    tpu.vector_store %arg8[%c0_18, %c0_19], %28 {strides = array<i32>} : memref<128x1xf32, #tpu.memory_space<vmem>>, vector<128x1xf32>,
    return
  }
  func.func @transform_0(%arg0: i32) -> (i32, i32) {
    %c0_i32 = arith.constant 0 : i32
    %c0_i32_0 = arith.constant 0 : i32
    return %arg0, %c0_i32 : i32, i32
  }
  func.func @transform_1(%arg0: i32) -> (i32, i32) {
    %c0_i32 = arith.constant 0 : i32
    %c0_i32_0 = arith.constant 0 : i32
    %c0_i32_1 = arith.constant 0 : i32
    return %c0_i32, %c0_i32_0 : i32, i32
  }
  func.func @transform_2(%arg0: i32) -> (i32, i32) {
    %c0_i32 = arith.constant 0 : i32
    %c0_i32_0 = arith.constant 0 : i32
    %c0_i32_1 = arith.constant 0 : i32
    return %c0_i32, %c0_i32_0 : i32, i32
  }
  func.func @transform_3(%arg0: i32) -> (i32, i32) {
    %c0_i32 = arith.constant 0 : i32
    %c0_i32_0 = arith.constant 0 : i32
    %c0_i32_1 = arith.constant 0 : i32
    return %c0_i32, %c0_i32_0 : i32, i32
  }
  func.func @transform_4(%arg0: i32) -> (i32, i32) {
    %c0_i32 = arith.constant 0 : i32
    %c0_i32_0 = arith.constant 0 : i32
    %c0_i32_1 = arith.constant 0 : i32
    return %c0_i32, %c0_i32_0 : i32, i32
  }
  func.func @transform_5(%arg0: i32) -> (i32, i32) {
    %c0_i32 = arith.constant 0 : i32
    %c0_i32_0 = arith.constant 0 : i32
    %c0_i32_1 = arith.constant 0 : i32
    return %c0_i32, %c0_i32_0 : i32, i32
  }
  func.func @transform_6(%arg0: i32) -> (i32, i32) {
    %c0_i32 = arith.constant 0 : i32
    %c0_i32_0 = arith.constant 0 : i32
    %c0_i32_1 = arith.constant 0 : i32
    return %c0_i32, %c0_i32_0 : i32, i32
  }
  func.func @transform_7(%arg0: i32) -> (i32, i32) {
    %c0_i32 = arith.constant 0 : i32
    %c0_i32_0 = arith.constant 0 : i32
    return %arg0, %c0_i32 : i32, i32
  }
}

</mosaic_0001>

<llo_original>
// kernel: tpu_custom_call.1
$region0: #{tpu_custom_call.1}
  #allocation0 [shape = 'u32[]', space=smem, size = 0x4, offset = 0x4, fixed_abs, tag = 'smem constant byte address 0x4 - core index']
  #allocation1 [shape = 'u32[72,128]{1,0:T(1,128)}', space=vmem, size = 0x9000, scoped, tag = 'internal scratch']
  #allocation2 [shape = 'f32[1,1]{1,0:T(1,128)S(6)}', space=smem, size = 0x200, scoped, tag = 'scoped memory for tpu_custom_call.1']
  %s0 = inlined_call_operand.vmem [shape: bf16[384,40], index: 0, kind: input, shape index: {}]
  %s1 = inlined_call_operand.vmem [shape: bf16[40,256], index: 1, kind: input, shape index: {}]
  %s2 = inlined_call_operand.vmem [shape: f32[1,256], index: 2, kind: input, shape index: {}]
  %s3 = inlined_call_operand.vmem [shape: bf16[256,32], index: 3, kind: input, shape index: {}]
  %s4 = inlined_call_operand.vmem [shape: f32[1,32], index: 4, kind: input, shape index: {}]
  %s5 = inlined_call_operand.vmem [shape: f32[1,32], index: 5, kind: input, shape index: {}]
  %s6 = inlined_call_operand.<no memory space> [shape: f32[1,1], index: 6, kind: input, shape index: {}]
  %s7 = inlined_call_operand.vmem [shape: f32[384,1], index: 7, kind: output, shape index: {}]
  %s8 = sld [smem:[#allocation0]]
  $region61: #{tpu_custom_call.1} parent=0
    _
  %s10 = ssub.s32 1, %s8
  %s11 = scalar_select 0, %s10, %s8
  %12 = sst [smem:[#allocation2]] %s6
  loop: start=0, step=1, limit=5
  $region2: #{tpu_custom_call.1} parent=0 // loop_pre_header
    _
  $region3: #{tpu_custom_call.1} parent=0 // loop_header
    %s14 = sphi 0, %s18
    %p15 = scmp.ge.s32.totalorder %s14, 5
    %s24 = sphi 0, %s26
    %s27 = sphi 0, %s24
    %s28 = sphi 0, %s27
    %s44 = sphi 0, %s28
    %s48 = sphi 0, %s48
    %s50 = sphi 0, %s48
    %s51 = sphi 0, %s50
    %s65 = sphi 0, %s51
    %s69 = sphi 0, %s69
    %s71 = sphi 0, %s69
    %s72 = sphi 0, %s71
    %s86 = sphi 0, %s72
    %s90 = sphi 0, %s90
    %s92 = sphi 0, %s90
    %s93 = sphi 0, %s92
    %s107 = sphi 0, %s93
    %s111 = sphi 0, %s111
    %s113 = sphi 0, %s111
    %s114 = sphi 0, %s113
    %s128 = sphi 0, %s114
    %s132 = sphi 0, %s132
    %s134 = sphi 0, %s132
    %s135 = sphi 0, %s134
    %s149 = sphi 0, %s135
    %s153 = sphi 0, %s153
    %s155 = sphi 0, %s153
    %s156 = sphi 0, %s155
    %s170 = sphi 0, %s156
    %s176 = sphi 0, %s178
    %s179 = sphi 0, %s176
    %s180 = sphi 0, %s179
    %s196 = sphi 0, %s180
  $region4: #{tpu_custom_call.1} parent=0 // loop_header_branch
    %17 = sbr.rel (%p15) target = $region8
  $region5: #{tpu_custom_call.1} parent=0 // loop_body
    %s19 = ssub.s32 %s14, 1
    %s20 = ssub.s32 %s14, 2
    %s21 = sadd.s32 %s14, 1
    %s22 = ssub.s32 %s14, %s21
    %p23 = scmp.eq.s32.totalorder %s22, 0
    %s25 = sadd.s32 %s24, 1
    %s26 = scalar_select %p23, %s24, %s25
    %p29 = pneg %p23
    %p30 = scmp.eq.s32.totalorder %s14, 2
    %p31 = por %p29, %p30
    %p32 = scmp.ne.s32.totalorder %s24, %s27
    %p33 = scmp.eq.s32.totalorder %s14, 0
    %p34 = por %p32, %p33
    %p35 = scmp.ne.s32.totalorder %s24, %s27
    %p36 = scmp.eq.s32.totalorder %s19, 2
    %p37 = por %p35, %p36
    %p38 = scmp.ne.s32.totalorder %s27, %s28
    %p39 = scmp.eq.s32.totalorder %s19, 0
    %p40 = por %p38, %p39
    %p41 = scmp.ne.s32.totalorder %s27, %s28
    %p42 = scmp.eq.s32.totalorder %s20, 2
    %p43 = por %p41, %p42
    %p45 = scmp.ne.s32.totalorder %s28, %s44
    %p46 = scmp.eq.s32.totalorder %s20, 0
    %p47 = por %p45, %p46
    %s49 = sadd.s32 %s48, 1
    %p52 = scmp.eq.s32.totalorder %s14, 2
    %p53 = scmp.ne.s32.totalorder %s48, %s50
    %p54 = scmp.eq.s32.totalorder %s14, 0
    %p55 = por %p53, %p54
    %p56 = scmp.ne.s32.totalorder %s48, %s50
    %p57 = scmp.eq.s32.totalorder %s19, 2
    %p58 = por %p56, %p57
    %p59 = scmp.ne.s32.totalorder %s50, %s51
    %p60 = scmp.eq.s32.totalorder %s19, 0
    %p61 = por %p59, %p60
    %p62 = scmp.ne.s32.totalorder %s50, %s51
    %p63 = scmp.eq.s32.totalorder %s20, 2
    %p64 = por %p62, %p63
    %p66 = scmp.ne.s32.totalorder %s51, %s65
    %p67 = scmp.eq.s32.totalorder %s20, 0
    %p68 = por %p66, %p67
    %s70 = sadd.s32 %s69, 1
    %p73 = scmp.eq.s32.totalorder %s14, 2
    %p74 = scmp.ne.s32.totalorder %s69, %s71
    %p75 = scmp.eq.s32.totalorder %s14, 0
    %p76 = por %p74, %p75
    %p77 = scmp.ne.s32.totalorder %s69, %s71
    %p78 = scmp.eq.s32.totalorder %s19, 2
    %p79 = por %p77, %p78
    %p80 = scmp.ne.s32.totalorder %s71, %s72
    %p81 = scmp.eq.s32.totalorder %s19, 0
    %p82 = por %p80, %p81
    %p83 = scmp.ne.s32.totalorder %s71, %s72
    %p84 = scmp.eq.s32.totalorder %s20, 2
    %p85 = por %p83, %p84
    %p87 = scmp.ne.s32.totalorder %s72, %s86
    %p88 = scmp.eq.s32.totalorder %s20, 0
    %p89 = por %p87, %p88
    %s91 = sadd.s32 %s90, 1
    %p94 = scmp.eq.s32.totalorder %s14, 2
    %p95 = scmp.ne.s32.totalorder %s90, %s92
    %p96 = scmp.eq.s32.totalorder %s14, 0
    %p97 = por %p95, %p96
    %p98 = scmp.ne.s32.totalorder %s90, %s92
    %p99 = scmp.eq.s32.totalorder %s19, 2
    %p100 = por %p98, %p99
    %p101 = scmp.ne.s32.totalorder %s92, %s93
    %p102 = scmp.eq.s32.totalorder %s19, 0
    %p103 = por %p101, %p102
    %p104 = scmp.ne.s32.totalorder %s92, %s93
    %p105 = scmp.eq.s32.totalorder %s20, 2
    %p106 = por %p104, %p105
    %p108 = scmp.ne.s32.totalorder %s93, %s107
    %p109 = scmp.eq.s32.totalorder %s20, 0
    %p110 = por %p108, %p109
    %s112 = sadd.s32 %s111, 1
    %p115 = scmp.eq.s32.totalorder %s14, 2
    %p116 = scmp.ne.s32.totalorder %s111, %s113
    %p117 = scmp.eq.s32.totalorder %s14, 0
    %p118 = por %p116, %p117
    %p119 = scmp.ne.s32.totalorder %s111, %s113
    %p120 = scmp.eq.s32.totalorder %s19, 2
    %p121 = por %p119, %p120
    %p122 = scmp.ne.s32.totalorder %s113, %s114
    %p123 = scmp.eq.s32.totalorder %s19, 0
    %p124 = por %p122, %p123
    %p125 = scmp.ne.s32.totalorder %s113, %s114
    %p126 = scmp.eq.s32.totalorder %s20, 2
    %p127 = por %p125, %p126
    %p129 = scmp.ne.s32.totalorder %s114, %s128
    %p130 = scmp.eq.s32.totalorder %s20, 0
    %p131 = por %p129, %p130
    %s133 = sadd.s32 %s132, 1
    %p136 = scmp.eq.s32.totalorder %s14, 2
    %p137 = scmp.ne.s32.totalorder %s132, %s134
    %p138 = scmp.eq.s32.totalorder %s14, 0
    %p139 = por %p137, %p138
    %p140 = scmp.ne.s32.totalorder %s132, %s134
    %p141 = scmp.eq.s32.totalorder %s19, 2
    %p142 = por %p140, %p141
    %p143 = scmp.ne.s32.totalorder %s134, %s135
    %p144 = scmp.eq.s32.totalorder %s19, 0
    %p145 = por %p143, %p144
    %p146 = scmp.ne.s32.totalorder %s134, %s135
    %p147 = scmp.eq.s32.totalorder %s20, 2
    %p148 = por %p146, %p147
    %p150 = scmp.ne.s32.totalorder %s135, %s149
    %p151 = scmp.eq.s32.totalorder %s20, 0
    %p152 = por %p150, %p151
    %s154 = sadd.s32 %s153, 1
    %p157 = scmp.eq.s32.totalorder %s14, 2
    %p158 = scmp.ne.s32.totalorder %s153, %s155
    %p159 = scmp.eq.s32.totalorder %s14, 0
    %p160 = por %p158, %p159
    %p161 = scmp.ne.s32.totalorder %s153, %s155
    %p162 = scmp.eq.s32.totalorder %s19, 2
    %p163 = por %p161, %p162
    %p164 = scmp.ne.s32.totalorder %s155, %s156
    %p165 = scmp.eq.s32.totalorder %s19, 0
    %p166 = por %p164, %p165
    %p167 = scmp.ne.s32.totalorder %s155, %s156
    %p168 = scmp.eq.s32.totalorder %s20, 2
    %p169 = por %p167, %p168
    %p171 = scmp.ne.s32.totalorder %s156, %s170
    %p172 = scmp.eq.s32.totalorder %s20, 0
    %p173 = por %p171, %p172
    %s174 = ssub.s32 %s14, %s21
    %p175 = scmp.eq.s32.totalorder %s174, 0
    %s177 = sadd.s32 %s176, 1
    %s178 = scalar_select %p175, %s176, %s177
    %p181 = pneg %p175
    %p182 = scmp.eq.s32.totalorder %s14, 2
    %p183 = por %p181, %p182
    %p184 = scmp.ne.s32.totalorder %s176, %s179
    %p185 = scmp.eq.s32.totalorder %s14, 0
    %p186 = por %p184, %p185
    %p187 = scmp.ne.s32.totalorder %s176, %s179
    %p188 = scmp.eq.s32.totalorder %s19, 2
    %p189 = por %p187, %p188
    %p190 = scmp.ne.s32.totalorder %s179, %s180
    %p191 = scmp.eq.s32.totalorder %s19, 0
    %p192 = por %p190, %p191
    %p193 = scmp.ne.s32.totalorder %s179, %s180
    %p194 = scmp.eq.s32.totalorder %s20, 2
    %p195 = por %p193, %p194
    %p197 = scmp.ne.s32.totalorder %s180, %s196
    %p198 = scmp.eq.s32.totalorder %s20, 0
    %p199 = por %p197, %p198
    %p200 = scmp.le.s32.totalorder 1, %s14
    %p201 = scmp.lt.s32.totalorder %s14, 4
    %p202 = pnand %p200, %p201
    %p203 = pneg %p202
    // Predicated region
    $region9: #{tpu_custom_call.1} parent=5 // pred_check
      _
    $region10: #{tpu_custom_call.1} parent=5 // pred_check_branch
      %205 = sbr.rel (%p202) target = $region12
    $region11: #{tpu_custom_call.1} parent=5 // pred_region
      %s206 = ssub.s32 %s14, 1
      // Predicated region
      $region13: #{tpu_custom_call.1} parent=11 // pred_check
        %p207 = pneg %p61
      $region14: #{tpu_custom_call.1} parent=11 // pred_check_branch
        %209 = sbr.rel (%p207) target = $region16
      $region15: #{tpu_custom_call.1} parent=11 // pred_region
        _
      $region16: #{tpu_custom_call.1} parent=11 // pred_fallthru
        _
      // Predicated region
      $region17: #{tpu_custom_call.1} parent=11 // pred_check
        %p210 = pneg %p82
      $region18: #{tpu_custom_call.1} parent=11 // pred_check_branch
        %212 = sbr.rel (%p210) target = $region20
      $region19: #{tpu_custom_call.1} parent=11 // pred_region
        _
      $region20: #{tpu_custom_call.1} parent=11 // pred_fallthru
        _
      // Predicated region
      $region21: #{tpu_custom_call.1} parent=11 // pred_check
        %p213 = pneg %p103
      $region22: #{tpu_custom_call.1} parent=11 // pred_check_branch
        %215 = sbr.rel (%p213) target = $region24
      $region23: #{tpu_custom_call.1} parent=11 // pred_region
        _
      $region24: #{tpu_custom_call.1} parent=11 // pred_fallthru
        _
      // Predicated region
      $region25: #{tpu_custom_call.1} parent=11 // pred_check
        %p216 = pneg %p124
      $region26: #{tpu_custom_call.1} parent=11 // pred_check_branch
        %218 = sbr.rel (%p216) target = $region28
      $region27: #{tpu_custom_call.1} parent=11 // pred_region
        _
      $region28: #{tpu_custom_call.1} parent=11 // pred_fallthru
        _
      // Predicated region
      $region29: #{tpu_custom_call.1} parent=11 // pred_check
        %p219 = pneg %p145
      $region30: #{tpu_custom_call.1} parent=11 // pred_check_branch
        %221 = sbr.rel (%p219) target = $region32
      $region31: #{tpu_custom_call.1} parent=11 // pred_region
        _
      $region32: #{tpu_custom_call.1} parent=11 // pred_fallthru
        _
      // Predicated region
      $region33: #{tpu_custom_call.1} parent=11 // pred_check
        %p222 = pneg %p166
      $region34: #{tpu_custom_call.1} parent=11 // pred_check_branch
        %224 = sbr.rel (%p222) target = $region36
      $region35: #{tpu_custom_call.1} parent=11 // pred_region
        _
      $region36: #{tpu_custom_call.1} parent=11 // pred_fallthru
        _
    $region12: #{tpu_custom_call.1} parent=5 // pred_fallthru
      _
    %p225 = scmp.lt.s32.totalorder %s14, 3
    // Predicated region
    $region37: #{tpu_custom_call.1} parent=5 // pred_check
      %p226 = pneg %p225
    $region38: #{tpu_custom_call.1} parent=5 // pred_check_branch
      %228 = sbr.rel (%p226) target = $region40
    $region39: #{tpu_custom_call.1} parent=5 // pred_region
      // Predicated region
      $region41: #{tpu_custom_call.1} parent=39 // pred_check
        %p229 = pneg %p34
      $region42: #{tpu_custom_call.1} parent=39 // pred_check_branch
        %231 = sbr.rel (%p229) target = $region44
      $region43: #{tpu_custom_call.1} parent=39 // pred_region
        %s232 = smul.u32 16, %s14
        %p233 = scmp.lt.s32.totalorder %s232, 47
        %s234 = scalar_select %p233, %s232, 47
        %s235 = smul.addr %s234, 4
        %s236 = scalar_lea.vmem %s0, %s235
        %s237 = smul.u32 16, %s14
      $region44: #{tpu_custom_call.1} parent=39 // pred_fallthru
        _
    $region40: #{tpu_custom_call.1} parent=5 // pred_fallthru
      _
    %p238 = scmp.le.s32.totalorder 1, %s14
    %p239 = scmp.lt.s32.totalorder %s14, 4
    %p240 = pnand %p238, %p239
    %p241 = pneg %p240
    // Predicated region
    $region45: #{tpu_custom_call.1} parent=5 // pred_check
      _
    $region46: #{tpu_custom_call.1} parent=5 // pred_check_branch
      %243 = sbr.rel (%p240) target = $region48
    $region47: #{tpu_custom_call.1} parent=5 // pred_region
      %s244 = ssub.s32 %s14, 1
      %s245 = smul.u32 16, %s19
      %p246 = scmp.lt.s32.totalorder %s245, 47
      %s247 = scalar_select %p246, %s245, 47
      %s248 = smul.addr %s247, 4
      %s249 = scalar_lea.vmem %s0, %s248
      %p250 = pneg %p40
      %p251 = pneg %p37
      %p252 = pneg %p61
      %p253 = pneg %p58
      %p254 = pneg %p82
      %p255 = pneg %p79
      %p256 = pneg %p103
      %p257 = pneg %p100
      %p258 = pneg %p124
      %p259 = pneg %p121
      %p260 = pneg %p145
      %p261 = pneg %p142
      %p262 = pneg %p166
      %p263 = pneg %p163
      %p264 = pneg %p192
      %p265 = pneg %p189
      %s266 = smul.u32 16, %s19
      %p267 = scmp.lt.s32.totalorder %s266, 47
      %s268 = scalar_select %p267, %s266, 47
      %s269 = smul.addr %s268, 8
      %s270 = scalar_lea.vmem %s7, %s269
      %s271 = smul.u32 16, %s19
      %p272 = scmp.lt.s32.totalorder %s271, 47
      %s273 = scalar_select %p272, %s271, 47
      %s274 = smul.addr %s273, 4
      %s275 = scalar_lea.vmem %s0, %s274
      %s276 = smul.u32 16, %s19
      %s277 = smul.u32 16, %s19
      %p278 = scmp.lt.s32.totalorder %s277, 47
      %s279 = scalar_select %p278, %s277, 47
      %s280 = smul.addr %s279, 8
      %s281 = scalar_lea.vmem %s7, %s280
      %s282 = smul.u32 16, %s19
      %v284 = vld [vmem:[%s275] sm:$0xf]
      %v285 = vld [vmem:[%s275 + $0x4] sm:$0xf]
      %v286 = vld [vmem:[%s275 + $0x8] sm:$0xf]
      %v287 = vld [vmem:[%s275 + $0xc] sm:$0xf]
      %v288 = vld [vmem:[%s275 + $0x10] sm:$0xf]
      %v289 = vld [vmem:[%s275 + $0x14] sm:$0xf]
      %v290 = vld [vmem:[%s275 + $0x18] sm:$0xf]
      %v291 = vld [vmem:[%s275 + $0x1c] sm:$0xf]
      %v292 = vld [vmem:[%s275 + $0x20] sm:$0xf]
      %v293 = vld [vmem:[%s275 + $0x24] sm:$0xf]
      %v294 = vld [vmem:[%s275 + $0x28] sm:$0xf]
      %v295 = vld [vmem:[%s275 + $0x2c] sm:$0xf]
      %v296 = vld [vmem:[%s275 + $0x30] sm:$0xf]
      %v297 = vld [vmem:[%s275 + $0x34] sm:$0xf]
      %v298 = vld [vmem:[%s275 + $0x38] sm:$0xf]
      %v299 = vld [vmem:[%s275 + $0x3c] sm:$0xf]
      %v300 = vld [vmem:[%s1] sm:$0xff]
      %v301 = vld [vmem:[%s1 + $0x8] sm:$0xff]
      %v302 = vld [vmem:[%s1 + $0x10] sm:$0xff]
      %v303 = vld [vmem:[%s1 + $0x18] sm:$0xff]
      %v304 = vld [vmem:[%s1 + $0x20] sm:$0xff]
      %v305 = vld [vmem:[%s2] sm:$0x3]
      %v307 = vperm.slane %v305, 0
      %v308 = vperm.slane %v305, 1
      %v327 = vunpack.c.l.b16 %v284
      %v328 = vunpack.c.l.b16 %v285
      %v329 = vunpack.c.l.b16 %v286
      %v330 = vunpack.c.l.b16 %v287
      %v331 = vunpack.c.l.b16 %v288
      %v332 = vunpack.c.l.b16 %v289
      %v333 = vunpack.c.l.b16 %v290
      %v334 = vunpack.c.l.b16 %v291
      %v335 = vunpack.c.l.b16 %v292
      %v336 = vunpack.c.l.b16 %v293
      %v337 = vunpack.c.l.b16 %v294
      %v338 = vunpack.c.l.b16 %v295
      %v339 = vunpack.c.l.b16 %v296
      %v340 = vunpack.c.l.b16 %v297
      %v341 = vunpack.c.l.b16 %v298
      %v342 = vunpack.c.l.b16 %v299
      %v343 = vpack.c.b16 %v328, %v327
      %v344 = vpack.c.b16 %v330, %v329
      %v345 = vpack.c.b16 %v332, %v331
      %v346 = vpack.c.b16 %v334, %v333
      %v347 = vpack.c.b16 %v336, %v335
      %v348 = vpack.c.b16 %v338, %v337
      %v349 = vpack.c.b16 %v340, %v339
      %v350 = vpack.c.b16 %v342, %v341
      %v356 = vunpack.c.l.b16 %v300
      %v357 = vunpack.c.h.b16 %v300
      %v358 = vunpack.c.l.b16 %v301
      %v359 = vunpack.c.h.b16 %v301
      %v360 = vunpack.c.l.b16 %v302
      %v361 = vunpack.c.h.b16 %v302
      %v362 = vunpack.c.l.b16 %v303
      %v363 = vunpack.c.h.b16 %v303
      %v364 = vunpack.c.l.b16 %v304
      %v365 = vunpack.c.h.b16 %v304
      %v366 = vpack.c.b16 %v358, %v356
      %v367 = vpack.c.b16 %v359, %v357
      %v368 = vpack.c.b16 %v362, %v360
      %v369 = vpack.c.b16 %v363, %v361
      %v370 = vpack.c.b16 %v364, %v364
      %v371 = vpack.c.b16 %v365, %v365
      %vm376 = vcmask 326656
      %v378 = vsel %vm376, %v343, 0
      %v381 = vsel %vm376, %v344, 0
      %v384 = vsel %vm376, %v345, 0
      %v387 = vsel %vm376, %v346, 0
      %v390 = vsel %vm376, %v347, 0
      %v393 = vsel %vm376, %v348, 0
      %v396 = vsel %vm376, %v349, 0
      %v399 = vsel %vm376, %v350, 0
      %vm401 = vcmask 1043456
      %v403 = vsel %vm401, %v370, 0
      %v406 = vsel %vm401, %v371, 0
      %408 = vmatpush.bf16.msra.mxu0 0
      %409 = vmatpush.bf16.msra.mxu0 0
      %410 = vmatpush.bf16.msra.mxu0 0
      %411 = vmatpush.bf16.msra.mxu0 0
      %412 = vmatpush.bf16.msra.mxu0 0
      %413 = vmatpush.bf16.msra.mxu0 %v403
      %414 = vmatpush.bf16.msra.mxu0 %v368
      %415 = vmatpush.bf16.msra.mxu0 %v366
      %416 = vmatmul.bf16.gmra.mxu0 %v378
      %v417 = vpop.f32.mrf.mxu0
      %v418 = vadd.f32 %v307, %v417
      %v419 = vpop.f32.mrf.mxu0
      %v420 = vadd.f32 %v307, %v419
      %421 = vmatmul.bf16.gmra.mxu0 %v381
      %v422 = vpop.f32.mrf.mxu0
      %v423 = vadd.f32 %v307, %v422
      %v424 = vpop.f32.mrf.mxu0
      %v425 = vadd.f32 %v307, %v424
      %426 = vmatmul.bf16.gmra.mxu0 %v384
      %v427 = vpop.f32.mrf.mxu0
      %v428 = vadd.f32 %v307, %v427
      %v429 = vpop.f32.mrf.mxu0
      %v430 = vadd.f32 %v307, %v429
      %431 = vmatmul.bf16.gmra.mxu0 %v387
      %v432 = vpop.f32.mrf.mxu0
      %v433 = vadd.f32 %v307, %v432
      %v434 = vpop.f32.mrf.mxu0
      %v435 = vadd.f32 %v307, %v434
      %436 = vmatmul.bf16.gmra.mxu0 %v390
      %v437 = vpop.f32.mrf.mxu0
      %v438 = vadd.f32 %v307, %v437
      %v439 = vpop.f32.mrf.mxu0
      %v440 = vadd.f32 %v307, %v439
      %441 = vmatmul.bf16.gmra.mxu0 %v393
      %v442 = vpop.f32.mrf.mxu0
      %v443 = vadd.f32 %v307, %v442
      %v444 = vpop.f32.mrf.mxu0
      %v445 = vadd.f32 %v307, %v444
      %446 = vmatmul.bf16.gmra.mxu0 %v396
      %v447 = vpop.f32.mrf.mxu0
      %v448 = vadd.f32 %v307, %v447
      %v449 = vpop.f32.mrf.mxu0
      %v450 = vadd.f32 %v307, %v449
      %451 = vmatmul.bf16.gmra.mxu0 %v399
      %v452 = vpop.f32.mrf.mxu0
      %v453 = vadd.f32 %v307, %v452
      %v454 = vpop.f32.mrf.mxu0
      %v455 = vadd.f32 %v307, %v454
      %456 = vdwg.mxu0
      %457 = vmatpush.bf16.msra.mxu0 0
      %458 = vmatpush.bf16.msra.mxu0 0
      %459 = vmatpush.bf16.msra.mxu0 0
      %460 = vmatpush.bf16.msra.mxu0 0
      %461 = vmatpush.bf16.msra.mxu0 0
      %462 = vmatpush.bf16.msra.mxu0 %v406
      %463 = vmatpush.bf16.msra.mxu0 %v369
      %464 = vmatpush.bf16.msra.mxu0 %v367
      %465 = vmatmul.bf16.gmra.mxu0 %v378
      %v466 = vpop.f32.mrf.mxu0
      %v467 = vadd.f32 %v308, %v466
      %v468 = vpop.f32.mrf.mxu0
      %v469 = vadd.f32 %v308, %v468
      %470 = vmatmul.bf16.gmra.mxu0 %v381
      %v471 = vpop.f32.mrf.mxu0
      %v472 = vadd.f32 %v308, %v471
      %v473 = vpop.f32.mrf.mxu0
      %v474 = vadd.f32 %v308, %v473
      %475 = vmatmul.bf16.gmra.mxu0 %v384
      %v476 = vpop.f32.mrf.mxu0
      %v477 = vadd.f32 %v308, %v476
      %v478 = vpop.f32.mrf.mxu0
      %v479 = vadd.f32 %v308, %v478
      %480 = vmatmul.bf16.gmra.mxu0 %v387
      %v481 = vpop.f32.mrf.mxu0
      %v482 = vadd.f32 %v308, %v481
      %v483 = vpop.f32.mrf.mxu0
      %v484 = vadd.f32 %v308, %v483
      %485 = vmatmul.bf16.gmra.mxu0 %v390
      %v486 = vpop.f32.mrf.mxu0
      %v487 = vadd.f32 %v308, %v486
      %v488 = vpop.f32.mrf.mxu0
      %v489 = vadd.f32 %v308, %v488
      %490 = vmatmul.bf16.gmra.mxu0 %v393
      %v491 = vpop.f32.mrf.mxu0
      %v492 = vadd.f32 %v308, %v491
      %v493 = vpop.f32.mrf.mxu0
      %v494 = vadd.f32 %v308, %v493
      %495 = vmatmul.bf16.gmra.mxu0 %v396
      %v496 = vpop.f32.mrf.mxu0
      %v497 = vadd.f32 %v308, %v496
      %v498 = vpop.f32.mrf.mxu0
      %v499 = vadd.f32 %v308, %v498
      %500 = vmatmul.bf16.gmra.mxu0 %v399
      %v501 = vpop.f32.mrf.mxu0
      %v502 = vadd.f32 %v308, %v501
      %v503 = vpop.f32.mrf.mxu0
      %v504 = vadd.f32 %v308, %v503
      %505 = vdwg.mxu0
      %v506 = vmax.f32 %v418, 0.0
      %v507 = vmax.f32 %v467, 0.0
      %v508 = vmax.f32 %v420, 0.0
      %v509 = vmax.f32 %v469, 0.0
      %v510 = vmax.f32 %v423, 0.0
      %v511 = vmax.f32 %v472, 0.0
      %v512 = vmax.f32 %v425, 0.0
      %v513 = vmax.f32 %v474, 0.0
      %v514 = vmax.f32 %v428, 0.0
      %v515 = vmax.f32 %v477, 0.0
      %v516 = vmax.f32 %v430, 0.0
      %v517 = vmax.f32 %v479, 0.0
      %v518 = vmax.f32 %v433, 0.0
      %v519 = vmax.f32 %v482, 0.0
      %v520 = vmax.f32 %v435, 0.0
      %v521 = vmax.f32 %v484, 0.0
      %v522 = vmax.f32 %v438, 0.0
      %v523 = vmax.f32 %v487, 0.0
      %v524 = vmax.f32 %v440, 0.0
      %v525 = vmax.f32 %v489, 0.0
      %v526 = vmax.f32 %v443, 0.0
      %v527 = vmax.f32 %v492, 0.0
      %v528 = vmax.f32 %v445, 0.0
      %v529 = vmax.f32 %v494, 0.0
      %v530 = vmax.f32 %v448, 0.0
      %v531 = vmax.f32 %v497, 0.0
      %v532 = vmax.f32 %v450, 0.0
      %v533 = vmax.f32 %v499, 0.0
      %v534 = vmax.f32 %v453, 0.0
      %v535 = vmax.f32 %v502, 0.0
      %v536 = vmax.f32 %v455, 0.0
      %v537 = vmax.f32 %v504, 0.0
      %v538 = vpack.c.bf16 %v508, %v506
      %v539 = vpack.c.bf16 %v509, %v507
      %v540 = vpack.c.bf16 %v512, %v510
      %v541 = vpack.c.bf16 %v513, %v511
      %v542 = vpack.c.bf16 %v516, %v514
      %v543 = vpack.c.bf16 %v517, %v515
      %v544 = vpack.c.bf16 %v520, %v518
      %v545 = vpack.c.bf16 %v521, %v519
      %v546 = vpack.c.bf16 %v524, %v522
      %v547 = vpack.c.bf16 %v525, %v523
      %v548 = vpack.c.bf16 %v528, %v526
      %v549 = vpack.c.bf16 %v529, %v527
      %v550 = vpack.c.bf16 %v532, %v530
      %v551 = vpack.c.bf16 %v533, %v531
      %v552 = vpack.c.bf16 %v536, %v534
      %v553 = vpack.c.bf16 %v537, %v535
      %v554 = vld [vmem:[%s3] sm:$0xf]
      %v555 = vld [vmem:[%s3 + $0x4] sm:$0xf]
      %v556 = vld [vmem:[%s3 + $0x8] sm:$0xf]
      %v557 = vld [vmem:[%s3 + $0xc] sm:$0xf]
      %v558 = vld [vmem:[%s3 + $0x10] sm:$0xf]
      %v559 = vld [vmem:[%s3 + $0x14] sm:$0xf]
      %v560 = vld [vmem:[%s3 + $0x18] sm:$0xf]
      %v561 = vld [vmem:[%s3 + $0x1c] sm:$0xf]
      %v562 = vld [vmem:[%s3 + $0x20] sm:$0xf]
      %v563 = vld [vmem:[%s3 + $0x24] sm:$0xf]
      %v564 = vld [vmem:[%s3 + $0x28] sm:$0xf]
      %v565 = vld [vmem:[%s3 + $0x2c] sm:$0xf]
      %v566 = vld [vmem:[%s3 + $0x30] sm:$0xf]
      %v567 = vld [vmem:[%s3 + $0x34] sm:$0xf]
      %v568 = vld [vmem:[%s3 + $0x38] sm:$0xf]
      %v569 = vld [vmem:[%s3 + $0x3c] sm:$0xf]
      %v570 = vld [vmem:[%s3 + $0x40] sm:$0xf]
      %v571 = vld [vmem:[%s3 + $0x44] sm:$0xf]
      %v572 = vld [vmem:[%s3 + $0x48] sm:$0xf]
      %v573 = vld [vmem:[%s3 + $0x4c] sm:$0xf]
      %v574 = vld [vmem:[%s3 + $0x50] sm:$0xf]
      %v575 = vld [vmem:[%s3 + $0x54] sm:$0xf]
      %v576 = vld [vmem:[%s3 + $0x58] sm:$0xf]
      %v577 = vld [vmem:[%s3 + $0x5c] sm:$0xf]
      %v578 = vld [vmem:[%s3 + $0x60] sm:$0xf]
      %v579 = vld [vmem:[%s3 + $0x64] sm:$0xf]
      %v580 = vld [vmem:[%s3 + $0x68] sm:$0xf]
      %v581 = vld [vmem:[%s3 + $0x6c] sm:$0xf]
      %v582 = vld [vmem:[%s3 + $0x70] sm:$0xf]
      %v583 = vld [vmem:[%s3 + $0x74] sm:$0xf]
      %v584 = vld [vmem:[%s3 + $0x78] sm:$0xf]
      %v585 = vld [vmem:[%s3 + $0x7c] sm:$0xf]
      %v586 = vld [vmem:[%s4] sm:$0x1]
      %v588 = vperm.slane %v586, 0
      %v622 = vunpack.c.l.b16 %v554
      %v623 = vunpack.c.l.b16 %v555
      %v624 = vunpack.c.l.b16 %v556
      %v625 = vunpack.c.l.b16 %v557
      %v626 = vunpack.c.l.b16 %v558
      %v627 = vunpack.c.l.b16 %v559
      %v628 = vunpack.c.l.b16 %v560
      %v629 = vunpack.c.l.b16 %v561
      %v630 = vunpack.c.l.b16 %v562
      %v631 = vunpack.c.l.b16 %v563
      %v632 = vunpack.c.l.b16 %v564
      %v633 = vunpack.c.l.b16 %v565
      %v634 = vunpack.c.l.b16 %v566
      %v635 = vunpack.c.l.b16 %v567
      %v636 = vunpack.c.l.b16 %v568
      %v637 = vunpack.c.l.b16 %v569
      %v638 = vunpack.c.l.b16 %v570
      %v639 = vunpack.c.l.b16 %v571
      %v640 = vunpack.c.l.b16 %v572
      %v641 = vunpack.c.l.b16 %v573
      %v642 = vunpack.c.l.b16 %v574
      %v643 = vunpack.c.l.b16 %v575
      %v644 = vunpack.c.l.b16 %v576
      %v645 = vunpack.c.l.b16 %v577
      %v646 = vunpack.c.l.b16 %v578
      %v647 = vunpack.c.l.b16 %v579
      %v648 = vunpack.c.l.b16 %v580
      %v649 = vunpack.c.l.b16 %v581
      %v650 = vunpack.c.l.b16 %v582
      %v651 = vunpack.c.l.b16 %v583
      %v652 = vunpack.c.l.b16 %v584
      %v653 = vunpack.c.l.b16 %v585
      %v654 = vpack.c.b16 %v623, %v622
      %v655 = vpack.c.b16 %v625, %v624
      %v656 = vpack.c.b16 %v627, %v626
      %v657 = vpack.c.b16 %v629, %v628
      %v658 = vpack.c.b16 %v631, %v630
      %v659 = vpack.c.b16 %v633, %v632
      %v660 = vpack.c.b16 %v635, %v634
      %v661 = vpack.c.b16 %v637, %v636
      %v662 = vpack.c.b16 %v639, %v638
      %v663 = vpack.c.b16 %v641, %v640
      %v664 = vpack.c.b16 %v643, %v642
      %v665 = vpack.c.b16 %v645, %v644
      %v666 = vpack.c.b16 %v647, %v646
      %v667 = vpack.c.b16 %v649, %v648
      %v668 = vpack.c.b16 %v651, %v650
      %v669 = vpack.c.b16 %v653, %v652
      %686 = vmatpush.bf16.msra.mxu0 %v661
      %687 = vmatpush.bf16.msra.mxu0 %v660
      %688 = vmatpush.bf16.msra.mxu0 %v659
      %689 = vmatpush.bf16.msra.mxu0 %v658
      %690 = vmatpush.bf16.msra.mxu0 %v657
      %691 = vmatpush.bf16.msra.mxu0 %v656
      %692 = vmatpush.bf16.msra.mxu0 %v655
      %693 = vmatpush.bf16.msra.mxu0 %v654
      %694 = vmatmul.bf16.gmra.mxu0 %v538
      %v695 = vpop.f32.mrf.mxu0
      %v696 = vadd.f32 %v588, %v695
      %v697 = vpop.f32.mrf.mxu0
      %v698 = vadd.f32 %v588, %v697
      %699 = vmatmul.bf16.gmra.mxu0 %v540
      %v700 = vpop.f32.mrf.mxu0
      %v701 = vadd.f32 %v588, %v700
      %v702 = vpop.f32.mrf.mxu0
      %v703 = vadd.f32 %v588, %v702
      %704 = vmatmul.bf16.gmra.mxu0 %v542
      %v705 = vpop.f32.mrf.mxu0
      %v706 = vadd.f32 %v588, %v705
      %v707 = vpop.f32.mrf.mxu0
      %v708 = vadd.f32 %v588, %v707
      %709 = vmatmul.bf16.gmra.mxu0 %v544
      %v710 = vpop.f32.mrf.mxu0
      %v711 = vadd.f32 %v588, %v710
      %v712 = vpop.f32.mrf.mxu0
      %v713 = vadd.f32 %v588, %v712
      %714 = vmatmul.bf16.gmra.mxu0 %v546
      %v715 = vpop.f32.mrf.mxu0
      %v716 = vadd.f32 %v588, %v715
      %v717 = vpop.f32.mrf.mxu0
      %v718 = vadd.f32 %v588, %v717
      %719 = vmatmul.bf16.gmra.mxu0 %v548
      %v720 = vpop.f32.mrf.mxu0
      %v721 = vadd.f32 %v588, %v720
      %v722 = vpop.f32.mrf.mxu0
      %v723 = vadd.f32 %v588, %v722
      %724 = vmatmul.bf16.gmra.mxu0 %v550
      %v725 = vpop.f32.mrf.mxu0
      %v726 = vadd.f32 %v588, %v725
      %v727 = vpop.f32.mrf.mxu0
      %v728 = vadd.f32 %v588, %v727
      %729 = vmatmul.bf16.gmra.mxu0 %v552
      %v730 = vpop.f32.mrf.mxu0
      %v731 = vadd.f32 %v588, %v730
      %v732 = vpop.f32.mrf.mxu0
      %v733 = vadd.f32 %v588, %v732
      %734 = vdwg.mxu0
      %735 = vmatpush.bf16.msra.mxu0 %v669
      %736 = vmatpush.bf16.msra.mxu0 %v668
      %737 = vmatpush.bf16.msra.mxu0 %v667
      %738 = vmatpush.bf16.msra.mxu0 %v666
      %739 = vmatpush.bf16.msra.mxu0 %v665
      %740 = vmatpush.bf16.msra.mxu0 %v664
      %741 = vmatpush.bf16.msra.mxu0 %v663
      %742 = vmatpush.bf16.msra.mxu0 %v662
      %743 = vmatmul.bf16.gmra.mxu0 %v539
      %v744 = vpop.f32.mrf.mxu0
      %v745 = vadd.f32 %v696, %v744
      %v746 = vpop.f32.mrf.mxu0
      %v747 = vadd.f32 %v698, %v746
      %748 = vmatmul.bf16.gmra.mxu0 %v541
      %v749 = vpop.f32.mrf.mxu0
      %v750 = vadd.f32 %v701, %v749
      %v751 = vpop.f32.mrf.mxu0
      %v752 = vadd.f32 %v703, %v751
      %753 = vmatmul.bf16.gmra.mxu0 %v543
      %v754 = vpop.f32.mrf.mxu0
      %v755 = vadd.f32 %v706, %v754
      %v756 = vpop.f32.mrf.mxu0
      %v757 = vadd.f32 %v708, %v756
      %758 = vmatmul.bf16.gmra.mxu0 %v545
      %v759 = vpop.f32.mrf.mxu0
      %v760 = vadd.f32 %v711, %v759
      %v761 = vpop.f32.mrf.mxu0
      %v762 = vadd.f32 %v713, %v761
      %763 = vmatmul.bf16.gmra.mxu0 %v547
      %v764 = vpop.f32.mrf.mxu0
      %v765 = vadd.f32 %v716, %v764
      %v766 = vpop.f32.mrf.mxu0
      %v767 = vadd.f32 %v718, %v766
      %768 = vmatmul.bf16.gmra.mxu0 %v549
      %v769 = vpop.f32.mrf.mxu0
      %v770 = vadd.f32 %v721, %v769
      %v771 = vpop.f32.mrf.mxu0
      %v772 = vadd.f32 %v723, %v771
      %773 = vmatmul.bf16.gmra.mxu0 %v551
      %v774 = vpop.f32.mrf.mxu0
      %v775 = vadd.f32 %v726, %v774
      %v776 = vpop.f32.mrf.mxu0
      %v777 = vadd.f32 %v728, %v776
      %778 = vmatmul.bf16.gmra.mxu0 %v553
      %v779 = vpop.f32.mrf.mxu0
      %v780 = vadd.f32 %v731, %v779
      %v781 = vpop.f32.mrf.mxu0
      %v782 = vadd.f32 %v733, %v781
      %783 = vdwg.mxu0
      %v784 = vmax.f32 %v745, 0.0
      %v785 = vmax.f32 %v747, 0.0
      %v786 = vmax.f32 %v750, 0.0
      %v787 = vmax.f32 %v752, 0.0
      %v788 = vmax.f32 %v755, 0.0
      %v789 = vmax.f32 %v757, 0.0
      %v790 = vmax.f32 %v760, 0.0
      %v791 = vmax.f32 %v762, 0.0
      %v792 = vmax.f32 %v765, 0.0
      %v793 = vmax.f32 %v767, 0.0
      %v794 = vmax.f32 %v770, 0.0
      %v795 = vmax.f32 %v772, 0.0
      %v796 = vmax.f32 %v775, 0.0
      %v797 = vmax.f32 %v777, 0.0
      %v798 = vmax.f32 %v780, 0.0
      %v799 = vmax.f32 %v782, 0.0
      %v800 = vld [vmem:[%s5] sm:$0x1]
      %v802 = vperm.slane %v800, 0
      %v804 = vmul.f32 %v784, %v802
      %v805 = vmul.f32 %v785, %v802
      %v806 = vmul.f32 %v786, %v802
      %v807 = vmul.f32 %v787, %v802
      %v808 = vmul.f32 %v788, %v802
      %v809 = vmul.f32 %v789, %v802
      %v810 = vmul.f32 %v790, %v802
      %v811 = vmul.f32 %v791, %v802
      %v812 = vmul.f32 %v792, %v802
      %v813 = vmul.f32 %v793, %v802
      %v814 = vmul.f32 %v794, %v802
      %v815 = vmul.f32 %v795, %v802
      %v816 = vmul.f32 %v796, %v802
      %v817 = vmul.f32 %v797, %v802
      %v818 = vmul.f32 %v798, %v802
      %v819 = vmul.f32 %v799, %v802
      %vm820 = vcmask 261120
      %v821 = vsel %vm820, %v804, 0.0
      %822 = vadd.xlane.f32.xlu0 %v821
      %v823 = vpop.xlane.xlu0 %822
      %v824 = vsel %vm820, %v805, 0.0
      %825 = vadd.xlane.f32.xlu0 %v824
      %v826 = vpop.xlane.xlu0 %825
      %v827 = vsel %vm820, %v806, 0.0
      %828 = vadd.xlane.f32.xlu0 %v827
      %v829 = vpop.xlane.xlu0 %828
      %v830 = vsel %vm820, %v807, 0.0
      %831 = vadd.xlane.f32.xlu0 %v830
      %v832 = vpop.xlane.xlu0 %831
      %v833 = vsel %vm820, %v808, 0.0
      %834 = vadd.xlane.f32.xlu0 %v833
      %v835 = vpop.xlane.xlu0 %834
      %v836 = vsel %vm820, %v809, 0.0
      %837 = vadd.xlane.f32.xlu0 %v836
      %v838 = vpop.xlane.xlu0 %837
      %v839 = vsel %vm820, %v810, 0.0
      %840 = vadd.xlane.f32.xlu0 %v839
      %v841 = vpop.xlane.xlu0 %840
      %v842 = vsel %vm820, %v811, 0.0
      %843 = vadd.xlane.f32.xlu0 %v842
      %v844 = vpop.xlane.xlu0 %843
      %v845 = vsel %vm820, %v812, 0.0
      %846 = vadd.xlane.f32.xlu0 %v845
      %v847 = vpop.xlane.xlu0 %846
      %v848 = vsel %vm820, %v813, 0.0
      %849 = vadd.xlane.f32.xlu0 %v848
      %v850 = vpop.xlane.xlu0 %849
      %v851 = vsel %vm820, %v814, 0.0
      %852 = vadd.xlane.f32.xlu0 %v851
      %v853 = vpop.xlane.xlu0 %852
      %v854 = vsel %vm820, %v815, 0.0
      %855 = vadd.xlane.f32.xlu0 %v854
      %v856 = vpop.xlane.xlu0 %855
      %v857 = vsel %vm820, %v816, 0.0
      %858 = vadd.xlane.f32.xlu0 %v857
      %v859 = vpop.xlane.xlu0 %858
      %v860 = vsel %vm820, %v817, 0.0
      %861 = vadd.xlane.f32.xlu0 %v860
      %v862 = vpop.xlane.xlu0 %861
      %v863 = vsel %vm820, %v818, 0.0
      %864 = vadd.xlane.f32.xlu0 %v863
      %v865 = vpop.xlane.xlu0 %864
      %v866 = vsel %vm820, %v819, 0.0
      %867 = vadd.xlane.f32.xlu0 %v866
      %v868 = vpop.xlane.xlu0 %867
      %s869 = sld [smem:[#allocation2]]
      %v870 = vstv %s869
      %v871 = vadd.f32 %v823, %v870
      %v872 = vadd.f32 %v826, %v870
      %v873 = vadd.f32 %v829, %v870
      %v874 = vadd.f32 %v832, %v870
      %v875 = vadd.f32 %v835, %v870
      %v876 = vadd.f32 %v838, %v870
      %v877 = vadd.f32 %v841, %v870
      %v878 = vadd.f32 %v844, %v870
      %v879 = vadd.f32 %v847, %v870
      %v880 = vadd.f32 %v850, %v870
      %v881 = vadd.f32 %v853, %v870
      %v882 = vadd.f32 %v856, %v870
      %v883 = vadd.f32 %v859, %v870
      %v884 = vadd.f32 %v862, %v870
      %v885 = vadd.f32 %v865, %v870
      %v886 = vadd.f32 %v868, %v870
      %v887 = vxor.u32 %v871, 2147483648
      %v888 = vxor.u32 %v872, 2147483648
      %v889 = vxor.u32 %v873, 2147483648
      %v890 = vxor.u32 %v874, 2147483648
      %v891 = vxor.u32 %v875, 2147483648
      %v892 = vxor.u32 %v876, 2147483648
      %v893 = vxor.u32 %v877, 2147483648
      %v894 = vxor.u32 %v878, 2147483648
      %v895 = vxor.u32 %v879, 2147483648
      %v896 = vxor.u32 %v880, 2147483648
      %v897 = vxor.u32 %v881, 2147483648
      %v898 = vxor.u32 %v882, 2147483648
      %v899 = vxor.u32 %v883, 2147483648
      %v900 = vxor.u32 %v884, 2147483648
      %v901 = vxor.u32 %v885, 2147483648
      %v902 = vxor.u32 %v886, 2147483648
      %v903 = vmul.f32 %v887, 1.442695
      %v904 = vpow.pop %v903
      %v905 = vmul.f32 %v888, 1.442695
      %v906 = vpow.pop %v905
      %v907 = vmul.f32 %v889, 1.442695
      %v908 = vpow.pop %v907
      %v909 = vmul.f32 %v890, 1.442695
      %v910 = vpow.pop %v909
      %v911 = vmul.f32 %v891, 1.442695
      %v912 = vpow.pop %v911
      %v913 = vmul.f32 %v892, 1.442695
      %v914 = vpow.pop %v913
      %v915 = vmul.f32 %v893, 1.442695
      %v916 = vpow.pop %v915
      %v917 = vmul.f32 %v894, 1.442695
      %v918 = vpow.pop %v917
      %v919 = vmul.f32 %v895, 1.442695
      %v920 = vpow.pop %v919
      %v921 = vmul.f32 %v896, 1.442695
      %v922 = vpow.pop %v921
      %v923 = vmul.f32 %v897, 1.442695
      %v924 = vpow.pop %v923
      %v925 = vmul.f32 %v898, 1.442695
      %v926 = vpow.pop %v925
      %v927 = vmul.f32 %v899, 1.442695
      %v928 = vpow.pop %v927
      %v929 = vmul.f32 %v900, 1.442695
      %v930 = vpow.pop %v929
      %v931 = vmul.f32 %v901, 1.442695
      %v932 = vpow.pop %v931
      %v933 = vmul.f32 %v902, 1.442695
      %v934 = vpow.pop %v933
      %v935 = vadd.f32 %v904, 1.0
      %v936 = vadd.f32 %v906, 1.0
      %v937 = vadd.f32 %v908, 1.0
      %v938 = vadd.f32 %v910, 1.0
      %v939 = vadd.f32 %v912, 1.0
      %v940 = vadd.f32 %v914, 1.0
      %v941 = vadd.f32 %v916, 1.0
      %v942 = vadd.f32 %v918, 1.0
      %v943 = vadd.f32 %v920, 1.0
      %v944 = vadd.f32 %v922, 1.0
      %v945 = vadd.f32 %v924, 1.0
      %v946 = vadd.f32 %v926, 1.0
      %v947 = vadd.f32 %v928, 1.0
      %v948 = vadd.f32 %v930, 1.0
      %v949 = vadd.f32 %v932, 1.0
      %v950 = vadd.f32 %v934, 1.0
      %v951 = vrcp.pop %v935
      %v952 = vmul.f32 %v935, %v951
      %v953 = vsub.f32 1.0, %v952
      %v954 = vmul.f32 %v951, %v953
      %v955 = vadd.f32 %v951, %v954
      %vm956 = vweird.f32 %v935
      %vm957 = vweird.f32 %v951
      %vm958 = vmor %vm956, %vm957
      %v959 = vsel %vm958, %v951, %v955
      %v960 = vand.u32 2147483647, %v935
      %vm961 = vcmp.eq.f32.partialorder %v960, 8.507059e+37
      %v962 = vand.u32 %v935, 2147483648
      %v963 = vor.u32 1.1754944e-38, %v962
      %v964 = vsel %vm961, %v963, %v959
      %v965 = vmul.f32 1.0, %v964
      %v966 = vrcp.pop %v936
      %v967 = vmul.f32 %v936, %v966
      %v968 = vsub.f32 1.0, %v967
      %v969 = vmul.f32 %v966, %v968
      %v970 = vadd.f32 %v966, %v969
      %vm971 = vweird.f32 %v936
      %vm972 = vweird.f32 %v966
      %vm973 = vmor %vm971, %vm972
      %v974 = vsel %vm973, %v966, %v970
      %v975 = vand.u32 2147483647, %v936
      %vm976 = vcmp.eq.f32.partialorder %v975, 8.507059e+37
      %v977 = vand.u32 %v936, 2147483648
      %v978 = vor.u32 1.1754944e-38, %v977
      %v979 = vsel %vm976, %v978, %v974
      %v980 = vmul.f32 1.0, %v979
      %v981 = vrcp.pop %v937
      %v982 = vmul.f32 %v937, %v981
      %v983 = vsub.f32 1.0, %v982
      %v984 = vmul.f32 %v981, %v983
      %v985 = vadd.f32 %v981, %v984
      %vm986 = vweird.f32 %v937
      %vm987 = vweird.f32 %v981
      %vm988 = vmor %vm986, %vm987
      %v989 = vsel %vm988, %v981, %v985
      %v990 = vand.u32 2147483647, %v937
      %vm991 = vcmp.eq.f32.partialorder %v990, 8.507059e+37
      %v992 = vand.u32 %v937, 2147483648
      %v993 = vor.u32 1.1754944e-38, %v992
      %v994 = vsel %vm991, %v993, %v989
      %v995 = vmul.f32 1.0, %v994
      %v996 = vrcp.pop %v938
      %v997 = vmul.f32 %v938, %v996
      %v998 = vsub.f32 1.0, %v997
      %v999 = vmul.f32 %v996, %v998
      %v1000 = vadd.f32 %v996, %v999
      %vm1001 = vweird.f32 %v938
      %vm1002 = vweird.f32 %v996
      %vm1003 = vmor %vm1001, %vm1002
      %v1004 = vsel %vm1003, %v996, %v1000
      %v1005 = vand.u32 2147483647, %v938
      %vm1006 = vcmp.eq.f32.partialorder %v1005, 8.507059e+37
      %v1007 = vand.u32 %v938, 2147483648
      %v1008 = vor.u32 1.1754944e-38, %v1007
      %v1009 = vsel %vm1006, %v1008, %v1004
      %v1010 = vmul.f32 1.0, %v1009
      %v1011 = vrcp.pop %v939
      %v1012 = vmul.f32 %v939, %v1011
      %v1013 = vsub.f32 1.0, %v1012
      %v1014 = vmul.f32 %v1011, %v1013
      %v1015 = vadd.f32 %v1011, %v1014
      %vm1016 = vweird.f32 %v939
      %vm1017 = vweird.f32 %v1011
      %vm1018 = vmor %vm1016, %vm1017
      %v1019 = vsel %vm1018, %v1011, %v1015
      %v1020 = vand.u32 2147483647, %v939
      %vm1021 = vcmp.eq.f32.partialorder %v1020, 8.507059e+37
      %v1022 = vand.u32 %v939, 2147483648
      %v1023 = vor.u32 1.1754944e-38, %v1022
      %v1024 = vsel %vm1021, %v1023, %v1019
      %v1025 = vmul.f32 1.0, %v1024
      %v1026 = vrcp.pop %v940
      %v1027 = vmul.f32 %v940, %v1026
      %v1028 = vsub.f32 1.0, %v1027
      %v1029 = vmul.f32 %v1026, %v1028
      %v1030 = vadd.f32 %v1026, %v1029
      %vm1031 = vweird.f32 %v940
      %vm1032 = vweird.f32 %v1026
      %vm1033 = vmor %vm1031, %vm1032
      %v1034 = vsel %vm1033, %v1026, %v1030
      %v1035 = vand.u32 2147483647, %v940
      %vm1036 = vcmp.eq.f32.partialorder %v1035, 8.507059e+37
      %v1037 = vand.u32 %v940, 2147483648
      %v1038 = vor.u32 1.1754944e-38, %v1037
      %v1039 = vsel %vm1036, %v1038, %v1034
      %v1040 = vmul.f32 1.0, %v1039
      %v1041 = vrcp.pop %v941
      %v1042 = vmul.f32 %v941, %v1041
      %v1043 = vsub.f32 1.0, %v1042
      %v1044 = vmul.f32 %v1041, %v1043
      %v1045 = vadd.f32 %v1041, %v1044
      %vm1046 = vweird.f32 %v941
      %vm1047 = vweird.f32 %v1041
      %vm1048 = vmor %vm1046, %vm1047
      %v1049 = vsel %vm1048, %v1041, %v1045
      %v1050 = vand.u32 2147483647, %v941
      %vm1051 = vcmp.eq.f32.partialorder %v1050, 8.507059e+37
      %v1052 = vand.u32 %v941, 2147483648
      %v1053 = vor.u32 1.1754944e-38, %v1052
      %v1054 = vsel %vm1051, %v1053, %v1049
      %v1055 = vmul.f32 1.0, %v1054
      %v1056 = vrcp.pop %v942
      %v1057 = vmul.f32 %v942, %v1056
      %v1058 = vsub.f32 1.0, %v1057
      %v1059 = vmul.f32 %v1056, %v1058
      %v1060 = vadd.f32 %v1056, %v1059
      %vm1061 = vweird.f32 %v942
      %vm1062 = vweird.f32 %v1056
      %vm1063 = vmor %vm1061, %vm1062
      %v1064 = vsel %vm1063, %v1056, %v1060
      %v1065 = vand.u32 2147483647, %v942
      %vm1066 = vcmp.eq.f32.partialorder %v1065, 8.507059e+37
      %v1067 = vand.u32 %v942, 2147483648
      %v1068 = vor.u32 1.1754944e-38, %v1067
      %v1069 = vsel %vm1066, %v1068, %v1064
      %v1070 = vmul.f32 1.0, %v1069
      %v1071 = vrcp.pop %v943
      %v1072 = vmul.f32 %v943, %v1071
      %v1073 = vsub.f32 1.0, %v1072
      %v1074 = vmul.f32 %v1071, %v1073
      %v1075 = vadd.f32 %v1071, %v1074
      %vm1076 = vweird.f32 %v943
      %vm1077 = vweird.f32 %v1071
      %vm1078 = vmor %vm1076, %vm1077
      %v1079 = vsel %vm1078, %v1071, %v1075
      %v1080 = vand.u32 2147483647, %v943
      %vm1081 = vcmp.eq.f32.partialorder %v1080, 8.507059e+37
      %v1082 = vand.u32 %v943, 2147483648
      %v1083 = vor.u32 1.1754944e-38, %v1082
      %v1084 = vsel %vm1081, %v1083, %v1079
      %v1085 = vmul.f32 1.0, %v1084
      %v1086 = vrcp.pop %v944
      %v1087 = vmul.f32 %v944, %v1086
      %v1088 = vsub.f32 1.0, %v1087
      %v1089 = vmul.f32 %v1086, %v1088
      %v1090 = vadd.f32 %v1086, %v1089
      %vm1091 = vweird.f32 %v944
      %vm1092 = vweird.f32 %v1086
      %vm1093 = vmor %vm1091, %vm1092
      %v1094 = vsel %vm1093, %v1086, %v1090
      %v1095 = vand.u32 2147483647, %v944
      %vm1096 = vcmp.eq.f32.partialorder %v1095, 8.507059e+37
      %v1097 = vand.u32 %v944, 2147483648
      %v1098 = vor.u32 1.1754944e-38, %v1097
      %v1099 = vsel %vm1096, %v1098, %v1094
      %v1100 = vmul.f32 1.0, %v1099
      %v1101 = vrcp.pop %v945
      %v1102 = vmul.f32 %v945, %v1101
      %v1103 = vsub.f32 1.0, %v1102
      %v1104 = vmul.f32 %v1101, %v1103
      %v1105 = vadd.f32 %v1101, %v1104
      %vm1106 = vweird.f32 %v945
      %vm1107 = vweird.f32 %v1101
      %vm1108 = vmor %vm1106, %vm1107
      %v1109 = vsel %vm1108, %v1101, %v1105
      %v1110 = vand.u32 2147483647, %v945
      %vm1111 = vcmp.eq.f32.partialorder %v1110, 8.507059e+37
      %v1112 = vand.u32 %v945, 2147483648
      %v1113 = vor.u32 1.1754944e-38, %v1112
      %v1114 = vsel %vm1111, %v1113, %v1109
      %v1115 = vmul.f32 1.0, %v1114
      %v1116 = vrcp.pop %v946
      %v1117 = vmul.f32 %v946, %v1116
      %v1118 = vsub.f32 1.0, %v1117
      %v1119 = vmul.f32 %v1116, %v1118
      %v1120 = vadd.f32 %v1116, %v1119
      %vm1121 = vweird.f32 %v946
      %vm1122 = vweird.f32 %v1116
      %vm1123 = vmor %vm1121, %vm1122
      %v1124 = vsel %vm1123, %v1116, %v1120
      %v1125 = vand.u32 2147483647, %v946
      %vm1126 = vcmp.eq.f32.partialorder %v1125, 8.507059e+37
      %v1127 = vand.u32 %v946, 2147483648
      %v1128 = vor.u32 1.1754944e-38, %v1127
      %v1129 = vsel %vm1126, %v1128, %v1124
      %v1130 = vmul.f32 1.0, %v1129
      %v1131 = vrcp.pop %v947
      %v1132 = vmul.f32 %v947, %v1131
      %v1133 = vsub.f32 1.0, %v1132
      %v1134 = vmul.f32 %v1131, %v1133
      %v1135 = vadd.f32 %v1131, %v1134
      %vm1136 = vweird.f32 %v947
      %vm1137 = vweird.f32 %v1131
      %vm1138 = vmor %vm1136, %vm1137
      %v1139 = vsel %vm1138, %v1131, %v1135
      %v1140 = vand.u32 2147483647, %v947
      %vm1141 = vcmp.eq.f32.partialorder %v1140, 8.507059e+37
      %v1142 = vand.u32 %v947, 2147483648
      %v1143 = vor.u32 1.1754944e-38, %v1142
      %v1144 = vsel %vm1141, %v1143, %v1139
      %v1145 = vmul.f32 1.0, %v1144
      %v1146 = vrcp.pop %v948
      %v1147 = vmul.f32 %v948, %v1146
      %v1148 = vsub.f32 1.0, %v1147
      %v1149 = vmul.f32 %v1146, %v1148
      %v1150 = vadd.f32 %v1146, %v1149
      %vm1151 = vweird.f32 %v948
      %vm1152 = vweird.f32 %v1146
      %vm1153 = vmor %vm1151, %vm1152
      %v1154 = vsel %vm1153, %v1146, %v1150
      %v1155 = vand.u32 2147483647, %v948
      %vm1156 = vcmp.eq.f32.partialorder %v1155, 8.507059e+37
      %v1157 = vand.u32 %v948, 2147483648
      %v1158 = vor.u32 1.1754944e-38, %v1157
      %v1159 = vsel %vm1156, %v1158, %v1154
      %v1160 = vmul.f32 1.0, %v1159
      %v1161 = vrcp.pop %v949
      %v1162 = vmul.f32 %v949, %v1161
      %v1163 = vsub.f32 1.0, %v1162
      %v1164 = vmul.f32 %v1161, %v1163
      %v1165 = vadd.f32 %v1161, %v1164
      %vm1166 = vweird.f32 %v949
      %vm1167 = vweird.f32 %v1161
      %vm1168 = vmor %vm1166, %vm1167
      %v1169 = vsel %vm1168, %v1161, %v1165
      %v1170 = vand.u32 2147483647, %v949
      %vm1171 = vcmp.eq.f32.partialorder %v1170, 8.507059e+37
      %v1172 = vand.u32 %v949, 2147483648
      %v1173 = vor.u32 1.1754944e-38, %v1172
      %v1174 = vsel %vm1171, %v1173, %v1169
      %v1175 = vmul.f32 1.0, %v1174
      %v1176 = vrcp.pop %v950
      %v1177 = vmul.f32 %v950, %v1176
      %v1178 = vsub.f32 1.0, %v1177
      %v1179 = vmul.f32 %v1176, %v1178
      %v1180 = vadd.f32 %v1176, %v1179
      %vm1181 = vweird.f32 %v950
      %vm1182 = vweird.f32 %v1176
      %vm1183 = vmor %vm1181, %vm1182
      %v1184 = vsel %vm1183, %v1176, %v1180
      %v1185 = vand.u32 2147483647, %v950
      %vm1186 = vcmp.eq.f32.partialorder %v1185, 8.507059e+37
      %v1187 = vand.u32 %v950, 2147483648
      %v1188 = vor.u32 1.1754944e-38, %v1187
      %v1189 = vsel %vm1186, %v1188, %v1184
      %v1190 = vmul.f32 1.0, %v1189
      %vm1191 = vcmask 7168
      %1192 = vst.msk [vmem:[%s281] sm:$0xff] %vm1191, %v965
      %1193 = vst.msk [vmem:[%s281 + $0x8] sm:$0xff] %vm1191, %v980
      %1194 = vst.msk [vmem:[%s281 + $0x10] sm:$0xff] %vm1191, %v995
      %1195 = vst.msk [vmem:[%s281 + $0x18] sm:$0xff] %vm1191, %v1010
      %1196 = vst.msk [vmem:[%s281 + $0x20] sm:$0xff] %vm1191, %v1025
      %1197 = vst.msk [vmem:[%s281 + $0x28] sm:$0xff] %vm1191, %v1040
      %1198 = vst.msk [vmem:[%s281 + $0x30] sm:$0xff] %vm1191, %v1055
      %1199 = vst.msk [vmem:[%s281 + $0x38] sm:$0xff] %vm1191, %v1070
      %1200 = vst.msk [vmem:[%s281 + $0x40] sm:$0xff] %vm1191, %v1085
      %1201 = vst.msk [vmem:[%s281 + $0x48] sm:$0xff] %vm1191, %v1100
      %1202 = vst.msk [vmem:[%s281 + $0x50] sm:$0xff] %vm1191, %v1115
      %1203 = vst.msk [vmem:[%s281 + $0x58] sm:$0xff] %vm1191, %v1130
      %1204 = vst.msk [vmem:[%s281 + $0x60] sm:$0xff] %vm1191, %v1145
      %1205 = vst.msk [vmem:[%s281 + $0x68] sm:$0xff] %vm1191, %v1160
      %1206 = vst.msk [vmem:[%s281 + $0x70] sm:$0xff] %vm1191, %v1175
      %1207 = vst.msk [vmem:[%s281 + $0x78] sm:$0xff] %vm1191, %v1190
      %s1208 = smul.u32 16, %s19
      %p1209 = scmp.lt.s32.totalorder %s1208, 47
      %s1210 = scalar_select %p1209, %s1208, 47
      %s1211 = smul.addr %s1210, 8
      %s1212 = scalar_lea.vmem %s7, %s1211
      // Predicated region
      $region49: #{tpu_custom_call.1} parent=47 // pred_check
        %p1213 = pneg %p189
      $region50: #{tpu_custom_call.1} parent=47 // pred_check_branch
        %1215 = sbr.rel (%p1213) target = $region52
      $region51: #{tpu_custom_call.1} parent=47 // pred_region
        %s1216 = smul.u32 16, %s19
      $region52: #{tpu_custom_call.1} parent=47 // pred_fallthru
        _
    $region48: #{tpu_custom_call.1} parent=5 // pred_fallthru
      _
    %p1217 = scmp.le.s32.totalorder 2, %s14
    // Predicated region
    $region53: #{tpu_custom_call.1} parent=5 // pred_check
      %p1218 = pneg %p1217
    $region54: #{tpu_custom_call.1} parent=5 // pred_check_branch
      %1220 = sbr.rel (%p1218) target = $region56
    $region55: #{tpu_custom_call.1} parent=5 // pred_region
      %s1221 = ssub.s32 %s14, 2
      // Predicated region
      $region57: #{tpu_custom_call.1} parent=55 // pred_check
        %p1222 = pneg %p195
      $region58: #{tpu_custom_call.1} parent=55 // pred_check_branch
        %1224 = sbr.rel (%p1222) target = $region60
      $region59: #{tpu_custom_call.1} parent=55 // pred_region
        %s1225 = smul.u32 16, %s20
        %p1226 = scmp.lt.s32.totalorder %s1225, 47
        %s1227 = scalar_select %p1226, %s1225, 47
        %s1228 = smul.addr %s1227, 8
        %s1229 = scalar_lea.vmem %s7, %s1228
      $region60: #{tpu_custom_call.1} parent=55 // pred_fallthru
        _
    $region56: #{tpu_custom_call.1} parent=5 // pred_fallthru
      _
  $region6: #{tpu_custom_call.1} parent=0 // loop_footer
    %s18 = sadd.s32 1, %s14
  $region7: #{tpu_custom_call.1} parent=0 // loop_footer_branch
    %13 = sbr.rel target = $region3
  $region8: #{tpu_custom_call.1} parent=0 // loop_exit
    _

</llo_original>
